<compile_context>
chip_gen: v6e
topology: v6e:2x2x1
jax: 0.10.0
libtpu: 0.0.40
codegen_flags: <defaults>
</compile_context>

<pallas_src>
import jax
import jax.numpy as jnp
from jax.experimental import pallas as pl
from jax.experimental.pallas import tpu as pltpu


def _make_attention_kernel(hw_total, thw, needs_mask):
    """hw_total: full H*W (mean divisor). thw: spatial tile. needs_mask: tail tile."""
    inv_hw = 1.0 / float(hw_total)

    def kernel(x_ref, w1t_ref, wtail_ref, o_ref, acc_ref):
        # x_ref:    (TN, C_in, THW)   input dtype (f32 or bf16)
        # w1t_ref:  (C_in, C_out)     f32  (conv1 weight, pre-transposed)
        # wtail_ref:(C_out, C_in)     f32  (conv1_2 @ conv2 folded, pre-transposed)
        # o_ref:    (TN, C_in)        output dtype
        # acc_ref:  (TN, C_in)        f32 accumulator scratch
        k = pl.program_id(1)

        @pl.when(k == 0)
        def _init():
            acc_ref[...] = jnp.zeros_like(acc_ref)

        # Cast to f32 in-kernel (load-bearing for bf16 inputs, esp. on v5e).
        x = x_ref[...].astype(jnp.float32)
        if needs_mask:
            lane = jax.lax.broadcasted_iota(jnp.int32, x.shape, dimension=2)
            x = jnp.where(k * thw + lane < hw_total, x, 0.0)
        acc_ref[...] += jnp.sum(x, axis=-1)  # partial spatial sum

        @pl.when(k == pl.num_programs(1) - 1)
        def _finalize():
            pooled = acc_ref[...] * inv_hw  # global average pool
            # 1x1 convs on (N, C, 1, 1) == channel matmuls (MXU).
            y = jnp.dot(pooled, w1t_ref[...], preferred_element_type=jnp.float32)
            y = jnp.maximum(y, 0.0)  # ReLU
            y = jnp.dot(y, wtail_ref[...], preferred_element_type=jnp.float32)
            o_ref[...] = jax.nn.sigmoid(y).astype(o_ref.dtype)

    return kernel


def _choose_tiles(N, C_in, HW, x_itemsize, tn=None, thw=None):
    # Batch tile: must equal N or be a multiple of 8 (output (TN, C_in) block).
    if tn is None:
        tn = N if N <= 8 else 8
    assert tn == N or tn % 8 == 0, tn

    # Spatial tile: multiple of 128 (lane axis) or the full extent.
    if thw is None:
        if HW <= 128:
            thw = HW
        else:
            # Keep each x input buffer <= ~8 MiB (double-buffered => ~16 MiB),
            # which fits scoped VMEM defaults on v5e/v6e and v7x (64 MiB phys).
            budget_bytes = 8 * 1024 * 1024
            cap = max(128, budget_bytes // max(1, tn * C_in * x_itemsize))
            thw = min(HW, 2048, cap)
            thw = max(128, (thw // 128) * 128)
    assert thw == HW or thw % 128 == 0, thw
    return tn, thw


def attention_forward(x, w1, w12, w2, *, tn=None, thw=None):
    """x: (N, C_in, H, W) NCHW; w1:(C_out,C_in), w12:(C_out,C_out), w2:(C_in,C_out)
    (PyTorch 1x1 conv weights squeezed from (out, in, 1, 1)). Returns (N, C_in, 1, 1)."""
    N, C_in, H, W = x.shape
    C_out = w1.shape[0]
    HW = H * W

    # Stream x in its native dtype (bf16 stays bf16 -> half the HBM bytes).
    x_flat = x.reshape(N, C_in, HW)

    # Pre-transpose conv1; fold conv1_2 and conv2 into one weight (exact: no
    # nonlinearity between them).
    w1t = jnp.transpose(w1).astype(jnp.float32)                       # (C_in, C_out)
    w_tail = (jnp.transpose(w12).astype(jnp.float32)
              @ jnp.transpose(w2).astype(jnp.float32))                # (C_out, C_in)

    tn, thw = _choose_tiles(N, C_in, HW, x_flat.dtype.itemsize, tn=tn, thw=thw)
    n_tiles = pl.cdiv(N, tn)
    k_tiles = pl.cdiv(HW, thw)
    needs_mask = (HW % thw) != 0

    out_dtype = x.dtype
    kernel = _make_attention_kernel(HW, thw, needs_mask)

    cost = pl.CostEstimate(
        flops=2 * N * C_in * HW + 4 * N * C_in * C_out,
        transcendentals=N * C_in,
        bytes_accessed=(x_flat.size * x_flat.dtype.itemsize
                        + (w1t.size + w_tail.size) * 4
                        + N * C_in * jnp.dtype(out_dtype).itemsize),
    )

    out = pl.pallas_call(
        kernel,
        out_shape=jax.ShapeDtypeStruct((N, C_in), out_dtype),
        grid_spec=pltpu.PrefetchScalarGridSpec(
            num_scalar_prefetch=0,
            grid=(n_tiles, k_tiles),
            in_specs=[
                # x tile streams along the HW (reduction) axis.
                pl.BlockSpec((tn, C_in, thw), lambda n, k: (n, 0, k)),
                # Weights: constant index maps -> stay VMEM-resident.
                pl.BlockSpec((C_in, C_out), lambda n, k: (0, 0)),
                pl.BlockSpec((C_out, C_in), lambda n, k: (0, 0)),
            ],
            out_specs=pl.BlockSpec((tn, C_in), lambda n, k: (n, 0)),
            scratch_shapes=[pltpu.VMEM((tn, C_in), jnp.float32)],
        ),
        compiler_params=pltpu.CompilerParams(
            dimension_semantics=("parallel", "arbitrary"),
        ),
        cost_estimate=cost,
    )(x_flat, w1t, w_tail)

    return out.reshape(N, C_in, 1, 1)


def _reference(x, w1, w12, w2):
    pooled = jnp.mean(x.astype(jnp.float32), axis=(2, 3))  # (N, C_in)
    y = pooled @ w1.T
    y = jnp.maximum(y, 0.0)
    y = y @ w12.T
    y = y @ w2.T
    return jax.nn.sigmoid(y)[:, :, None, None]


if __name__ == "__main__":
    key = jax.random.PRNGKey(0)
    N, C_in, C_out, H, W = 2, 4, 8, 16, 16

    k_x, k_w1, k_w12, k_w2 = jax.random.split(key, 4)
    x = jax.random.normal(k_x, (N, C_in, H, W), dtype=jnp.float32)
    # Deterministic "kaiming-ish" init for the three 1x1 conv weights (no bias).
    w1 = jax.random.normal(k_w1, (C_out, C_in), dtype=jnp.float32) * (1.0 / C_in) ** 0.5
    w12 = jax.random.normal(k_w12, (C_out, C_out), dtype=jnp.float32) * (1.0 / C_out) ** 0.5
    w2 = jax.random.normal(k_w2, (C_in, C_out), dtype=jnp.float32) * (1.0 / C_out) ** 0.5

    # Main run: thw=128 forces a 2-step accumulated reduction over H*W=256,
    # exercising the gridded init/accumulate/finalize path.
    out = attention_forward(x, w1, w12, w2, thw=128)
    out = jax.block_until_ready(out)

    ref = _reference(x, w1, w12, w2)
    assert out.shape == (N, C_in, 1, 1), out.shape
    assert jnp.allclose(out, ref, atol=1e-5, rtol=1e-5), float(jnp.max(jnp.abs(out - ref)))

    # Extra check: H*W = 200 is not a multiple of 128 -> exercises the in-kernel
    # remainder mask (the mean divisor stays exact).
    x2 = jax.random.normal(jax.random.PRNGKey(1), (N, C_in, 10, 20), dtype=jnp.float32)
    out2 = jax.block_until_ready(attention_forward(x2, w1, w12, w2))
    ref2 = _reference(x2, w1, w12, w2)
    assert jnp.allclose(out2, ref2, atol=1e-5, rtol=1e-5), float(jnp.max(jnp.abs(out2 - ref2)))

    print("KERNEL_OK")
</pallas_src>

<mosaic_0001>
module attributes {stable_mosaic.version = 11 : i64} {
  func.func @kernel(%arg0: i32, %arg1: i32, %arg2: memref<2x4x128xf32, #tpu.memory_space<vmem>>, %arg3: memref<4x8xf32, #tpu.memory_space<vmem>>, %arg4: memref<8x4xf32, #tpu.memory_space<vmem>>, %arg5: memref<2x4xf32, #tpu.memory_space<vmem>>, %arg6: memref<2x4xf32, #tpu.memory_space<vmem>>) attributes {dimension_semantics = [#tpu.dimension_semantics<parallel>, #tpu.dimension_semantics<arbitrary>], iteration_bounds = array<i64: 1, 2>, scalar_prefetch = 0 : i64, scratch_operands = 1 : i64, tpu.core_type = #tpu.core_type<tc>, window_params = [{transform_indices = @transform_0, window_bounds = array<i64: 2, 4, 128>}, {pipeline_mode = #tpu.pipeline_mode<synchronous>, transform_indices = @transform_1, window_bounds = array<i64: 4, 8>}, {pipeline_mode = #tpu.pipeline_mode<synchronous>, transform_indices = @transform_2, window_bounds = array<i64: 8, 4>}, {transform_indices = @transform_3, window_bounds = array<i64: 2, 4>}]} {
    %c0_i32 = arith.constant 0 : i32
    %0 = arith.cmpi eq, %arg1, %c0_i32 : i32
    %1 = arith.extui %0 : i1 to i32
    %c0_i32_0 = arith.constant 0 : i32
    %2 = arith.cmpi ne, %1, %c0_i32_0 : i32
    scf.if %2 {
      %cst_8 = arith.constant 0.000000e+00 : f32
      %11 = vector.broadcast %cst_8 : f32 to vector<2x4xf32>
      %c0_9 = arith.constant 0 : index
      %c0_10 = arith.constant 0 : index
      %12 = vector.load %arg6[%c0_9, %c0_10] : memref<2x4xf32, #tpu.memory_space<vmem>>, vector<2x4xf32>
      tpu.vector_store %arg6[%c0_9, %c0_10], %11 {strides = array<i32>} : memref<2x4xf32, #tpu.memory_space<vmem>>, vector<2x4xf32>,
    } else {
    }
    %c0 = arith.constant 0 : index
    %c0_1 = arith.constant 0 : index
    %c0_2 = arith.constant 0 : index
    %3 = vector.load %arg2[%c0, %c0_1, %c0_2] : memref<2x4x128xf32, #tpu.memory_space<vmem>>, vector<2x4x128xf32>
    %c0_3 = arith.constant 0 : index
    %c0_4 = arith.constant 0 : index
    %4 = vector.load %arg6[%c0_3, %c0_4] : memref<2x4xf32, #tpu.memory_space<vmem>>, vector<2x4xf32>
    %cst = arith.constant dense<0.000000e+00> : vector<2x4xf32>
    %5 = vector.multi_reduction <add>, %3, %cst [2] : vector<2x4x128xf32> to vector<2x4xf32>
    %6 = arith.addf %4, %5 : vector<2x4xf32>
    %c0_5 = arith.constant 0 : index
    %c0_6 = arith.constant 0 : index
    %7 = vector.load %arg6[%c0_5, %c0_6] : memref<2x4xf32, #tpu.memory_space<vmem>>, vector<2x4xf32>
    tpu.vector_store %arg6[%c0_5, %c0_6], %6 {strides = array<i32>} : memref<2x4xf32, #tpu.memory_space<vmem>>, vector<2x4xf32>,
    %c1_i32 = arith.constant 1 : i32
    %8 = arith.cmpi eq, %arg1, %c1_i32 : i32
    %9 = arith.extui %8 : i1 to i32
    %c0_i32_7 = arith.constant 0 : i32
    %10 = arith.cmpi ne, %9, %c0_i32_7 : i32
    scf.if %10 {
      %c0_8 = arith.constant 0 : index
      %c0_9 = arith.constant 0 : index
      %11 = vector.load %arg6[%c0_8, %c0_9] : memref<2x4xf32, #tpu.memory_space<vmem>>, vector<2x4xf32>
      %cst_10 = arith.constant 3.906250e-03 : f32
      %12 = vector.broadcast %cst_10 : f32 to vector<2x4xf32>
      %13 = arith.mulf %11, %12 : vector<2x4xf32>
      %c0_11 = arith.constant 0 : index
      %c0_12 = arith.constant 0 : index
      %14 = vector.load %arg3[%c0_11, %c0_12] : memref<4x8xf32, #tpu.memory_space<vmem>>, vector<4x8xf32>
      %cst_13 = arith.constant dense<0.000000e+00> : vector<2x8xf32>
      %15 = tpu.matmul %13, %14, %cst_13 {dimension_numbers = #tpu.dot_dimension_numbers<[1], [0], [0], [1], [0, 0, 1, 1], [], []>} : vector<2x4xf32>, vector<4x8xf32>, vector<2x8xf32> -> vector<2x8xf32>
      %cst_14 = arith.constant 0.000000e+00 : f32
      %16 = vector.broadcast %cst_14 : f32 to vector<2x8xf32>
      %17 = arith.maximumf %15, %16 : vector<2x8xf32>
      %c0_15 = arith.constant 0 : index
      %c0_16 = arith.constant 0 : index
      %18 = vector.load %arg4[%c0_15, %c0_16] : memref<8x4xf32, #tpu.memory_space<vmem>>, vector<8x4xf32>
      %cst_17 = arith.constant dense<0.000000e+00> : vector<2x4xf32>
      %19 = tpu.matmul %17, %18, %cst_17 {dimension_numbers = #tpu.dot_dimension_numbers<[1], [0], [0], [1], [0, 0, 1, 1], [], []>} : vector<2x8xf32>, vector<8x4xf32>, vector<2x4xf32> -> vector<2x4xf32>
      %20 = arith.negf %19 : vector<2x4xf32>
      %21 = math.exp %20 : vector<2x4xf32>
      %cst_18 = arith.constant 1.000000e+00 : f32
      %22 = vector.broadcast %cst_18 : f32 to vector<2x4xf32>
      %23 = arith.addf %22, %21 : vector<2x4xf32>
      %24 = arith.divf %22, %23 : vector<2x4xf32>
      %c0_19 = arith.constant 0 : index
      %c0_20 = arith.constant 0 : index
      %25 = vector.load %arg5[%c0_19, %c0_20] : memref<2x4xf32, #tpu.memory_space<vmem>>, vector<2x4xf32>
      tpu.vector_store %arg5[%c0_19, %c0_20], %24 {strides = array<i32>} : memref<2x4xf32, #tpu.memory_space<vmem>>, vector<2x4xf32>,
    } else {
    }
    return
  }
  func.func @transform_0(%arg0: i32, %arg1: i32) -> (i32, i32, i32) {
    %c0_i32 = arith.constant 0 : i32
    %c0_i32_0 = arith.constant 0 : i32
    return %arg0, %c0_i32, %arg1 : i32, i32, i32
  }
  func.func @transform_1(%arg0: i32, %arg1: i32) -> (i32, i32) {
    %c0_i32 = arith.constant 0 : i32
    %c0_i32_0 = arith.constant 0 : i32
    %c0_i32_1 = arith.constant 0 : i32
    return %c0_i32, %c0_i32_0 : i32, i32
  }
  func.func @transform_2(%arg0: i32, %arg1: i32) -> (i32, i32) {
    %c0_i32 = arith.constant 0 : i32
    %c0_i32_0 = arith.constant 0 : i32
    %c0_i32_1 = arith.constant 0 : i32
    return %c0_i32, %c0_i32_0 : i32, i32
  }
  func.func @transform_3(%arg0: i32, %arg1: i32) -> (i32, i32) {
    %c0_i32 = arith.constant 0 : i32
    %c0_i32_0 = arith.constant 0 : i32
    return %arg0, %c0_i32 : i32, i32
  }
}

</mosaic_0001>

<llo_original>
// kernel: tpu_custom_call.1
$region0: #{tpu_custom_call.1}
  #allocation0 [shape = 'u32[]', space=smem, size = 0x4, offset = 0x4, fixed_abs, tag = 'smem constant byte address 0x4 - core index']
  #allocation1 [shape = 'u32[144,128]{1,0:T(1,128)}', space=vmem, size = 0x12000, scoped, tag = 'internal scratch']
  #allocation2 [shape = 'f32[2,4]{1,0:T(2,128)}', space=vmem, size = 0x400, scoped, tag = 'scratch operand']
  %s0 = inlined_call_operand.hbm [shape: f32[2,4,256], index: 0, kind: input, shape index: {}]
  %s1 = inlined_call_operand.vmem [shape: f32[4,8], index: 1, kind: input, shape index: {}]
  %s2 = inlined_call_operand.vmem [shape: f32[8,4], index: 2, kind: input, shape index: {}]
  %s3 = inlined_call_operand.hbm [shape: f32[2,4], index: 3, kind: output, shape index: {}]
  %s4 = sld [smem:[#allocation0]]
  $region57: #{tpu_custom_call.1} parent=0
    _
  %s6 = ssub.s32 1, %s4
  %s7 = scalar_select 0, %s6, %s4
  $region1: #{tpu_custom_call.1} parent=0
    #allocation3 [shape = 'u8[8192]{0}', space=vmem, size = 0x2000, scoped, tag = 'input window, operand 0']
    #allocation4 [shape = 's32[2]{0}', space=sflag, size = 0x8, scoped, tag = 'scoped memory for tpu_custom_call.1']
    #allocation5 [shape = 's32[2]{0}', space=sflag, size = 0x8, scoped, tag = 'scoped memory for tpu_custom_call.1']
    #allocation6 [shape = 'u8[1024]{0}', space=vmem, size = 0x400, scoped, tag = 'output window, operand 0, single buffered']
    %8 = vsyncpa [#allocation4], 0
    %s9 = scalar_lea.sflag [#allocation4], 1
    %10 = vsyncpa %s9, 0
    %11 = vsyncpa [#allocation5], 0
    loop: start=0, step=1, limit=4
    $region2: #{tpu_custom_call.1} parent=1 // loop_pre_header
      _
    $region3: #{tpu_custom_call.1} parent=1 // loop_header
      %s13 = sphi 0, %s17
      %p14 = scmp.ge.s32.totalorder %s13, 4
      %s20 = sphi 0, %s32
      %s21 = sphi 0, %s28
      %s22 = sphi 0, %s20
      %s23 = sphi 0, %s21
      %s24 = sphi 0, %s22
      %s25 = sphi 0, %s23
      %s37 = sphi 0, %s39
      %s40 = sphi 0, %s37
      %s41 = sphi 0, %s40
      %s57 = sphi 0, %s41
      %s61 = sphi 0, %s61
      %s63 = sphi 0, %s61
      %s64 = sphi 0, %s63
      %s78 = sphi 0, %s64
      %s82 = sphi 0, %s82
      %s84 = sphi 0, %s82
      %s85 = sphi 0, %s84
      %s99 = sphi 0, %s85
      %s105 = sphi 0, %s107
      %s108 = sphi 0, %s105
      %s109 = sphi 0, %s108
      %s125 = sphi 0, %s109
    $region4: #{tpu_custom_call.1} parent=1 // loop_header_branch
      %16 = sbr.rel (%p14) target = $region8
    $region5: #{tpu_custom_call.1} parent=1 // loop_body
      %s18 = ssub.s32 %s13, 1
      %s19 = ssub.s32 %s13, 2
      %s26 = sadd.s32 1, %s21
      %p27 = scmp.ge.s32.totalorder %s26, 2
      %s28 = scalar_select %p27, 0, %s26
      %s29 = sadd.s32 1, %s20
      %s30 = scalar_select %p27, %s29, %s20
      %p31 = scmp.ge.s32.totalorder %s30, 1
      %s32 = scalar_select %p31, 0, %s30
      %s33 = ssub.s32 %s20, %s32
      %s34 = ssub.s32 %s21, %s28
      %s35 = sor.u32 %s33, %s34
      %p36 = scmp.eq.s32.totalorder %s35, 0
      %s38 = sadd.s32 %s37, 1
      %s39 = scalar_select %p36, %s37, %s38
      %p42 = pneg %p36
      %p43 = scmp.eq.s32.totalorder %s13, 1
      %p44 = por %p42, %p43
      %p45 = scmp.ne.s32.totalorder %s37, %s40
      %p46 = scmp.eq.s32.totalorder %s13, 0
      %p47 = por %p45, %p46
      %p48 = scmp.ne.s32.totalorder %s37, %s40
      %p49 = scmp.eq.s32.totalorder %s18, 1
      %p50 = por %p48, %p49
      %p51 = scmp.ne.s32.totalorder %s40, %s41
      %p52 = scmp.eq.s32.totalorder %s18, 0
      %p53 = por %p51, %p52
      %p54 = scmp.ne.s32.totalorder %s40, %s41
      %p55 = scmp.eq.s32.totalorder %s19, 1
      %p56 = por %p54, %p55
      %p58 = scmp.ne.s32.totalorder %s41, %s57
      %p59 = scmp.eq.s32.totalorder %s19, 0
      %p60 = por %p58, %p59
      %s62 = sadd.s32 %s61, 1
      %p65 = scmp.eq.s32.totalorder %s13, 1
      %p66 = scmp.ne.s32.totalorder %s61, %s63
      %p67 = scmp.eq.s32.totalorder %s13, 0
      %p68 = por %p66, %p67
      %p69 = scmp.ne.s32.totalorder %s61, %s63
      %p70 = scmp.eq.s32.totalorder %s18, 1
      %p71 = por %p69, %p70
      %p72 = scmp.ne.s32.totalorder %s63, %s64
      %p73 = scmp.eq.s32.totalorder %s18, 0
      %p74 = por %p72, %p73
      %p75 = scmp.ne.s32.totalorder %s63, %s64
      %p76 = scmp.eq.s32.totalorder %s19, 1
      %p77 = por %p75, %p76
      %p79 = scmp.ne.s32.totalorder %s64, %s78
      %p80 = scmp.eq.s32.totalorder %s19, 0
      %p81 = por %p79, %p80
      %s83 = sadd.s32 %s82, 1
      %p86 = scmp.eq.s32.totalorder %s13, 1
      %p87 = scmp.ne.s32.totalorder %s82, %s84
      %p88 = scmp.eq.s32.totalorder %s13, 0
      %p89 = por %p87, %p88
      %p90 = scmp.ne.s32.totalorder %s82, %s84
      %p91 = scmp.eq.s32.totalorder %s18, 1
      %p92 = por %p90, %p91
      %p93 = scmp.ne.s32.totalorder %s84, %s85
      %p94 = scmp.eq.s32.totalorder %s18, 0
      %p95 = por %p93, %p94
      %p96 = scmp.ne.s32.totalorder %s84, %s85
      %p97 = scmp.eq.s32.totalorder %s19, 1
      %p98 = por %p96, %p97
      %p100 = scmp.ne.s32.totalorder %s85, %s99
      %p101 = scmp.eq.s32.totalorder %s19, 0
      %p102 = por %p100, %p101
      %s103 = ssub.s32 %s20, %s32
      %p104 = scmp.eq.s32.totalorder %s103, 0
      %s106 = sadd.s32 %s105, 1
      %s107 = scalar_select %p104, %s105, %s106
      %p110 = pneg %p104
      %p111 = scmp.eq.s32.totalorder %s13, 1
      %p112 = por %p110, %p111
      %p113 = scmp.ne.s32.totalorder %s105, %s108
      %p114 = scmp.eq.s32.totalorder %s13, 0
      %p115 = por %p113, %p114
      %p116 = scmp.ne.s32.totalorder %s105, %s108
      %p117 = scmp.eq.s32.totalorder %s18, 1
      %p118 = por %p116, %p117
      %p119 = scmp.ne.s32.totalorder %s108, %s109
      %p120 = scmp.eq.s32.totalorder %s18, 0
      %p121 = por %p119, %p120
      %p122 = scmp.ne.s32.totalorder %s108, %s109
      %p123 = scmp.eq.s32.totalorder %s19, 1
      %p124 = por %p122, %p123
      %p126 = scmp.ne.s32.totalorder %s109, %s125
      %p127 = scmp.eq.s32.totalorder %s19, 0
      %p128 = por %p126, %p127
      %p129 = scmp.le.s32.totalorder 1, %s13
      %p130 = scmp.lt.s32.totalorder %s13, 3
      %p131 = pnand %p129, %p130
      %p132 = pneg %p131
      // Predicated region
      $region9: #{tpu_custom_call.1} parent=5 // pred_check
        _
      $region10: #{tpu_custom_call.1} parent=5 // pred_check_branch
        %134 = sbr.rel (%p131) target = $region12
      $region11: #{tpu_custom_call.1} parent=5 // pred_region
        %s135 = ssub.s32 %s13, 1
        // Predicated region
        $region13: #{tpu_custom_call.1} parent=11 // pred_check
          %p136 = pneg %p74
        $region14: #{tpu_custom_call.1} parent=11 // pred_check_branch
          %138 = sbr.rel (%p136) target = $region16
        $region15: #{tpu_custom_call.1} parent=11 // pred_region
          _
        $region16: #{tpu_custom_call.1} parent=11 // pred_fallthru
          _
        // Predicated region
        $region17: #{tpu_custom_call.1} parent=11 // pred_check
          %p139 = pneg %p95
        $region18: #{tpu_custom_call.1} parent=11 // pred_check_branch
          %141 = sbr.rel (%p139) target = $region20
        $region19: #{tpu_custom_call.1} parent=11 // pred_region
          _
        $region20: #{tpu_custom_call.1} parent=11 // pred_fallthru
          _
      $region12: #{tpu_custom_call.1} parent=5 // pred_fallthru
        _
      %p142 = scmp.lt.s32.totalorder %s13, 2
      // Predicated region
      $region21: #{tpu_custom_call.1} parent=5 // pred_check
        %p143 = pneg %p142
      $region22: #{tpu_custom_call.1} parent=5 // pred_check_branch
        %145 = sbr.rel (%p143) target = $region24
      $region23: #{tpu_custom_call.1} parent=5 // pred_region
        // Predicated region
        $region25: #{tpu_custom_call.1} parent=23 // pred_check
          %p146 = pneg %p47
        $region26: #{tpu_custom_call.1} parent=23 // pred_check_branch
          %148 = sbr.rel (%p146) target = $region28
        $region27: #{tpu_custom_call.1} parent=23 // pred_region
          %s149 = sand.u32 %s37, 1
          %s150 = scalar_lea.sflag [#allocation4], %s149
          %s151 = sand.u32 %s37, 1
          %s152 = smul.addr %s151, 8
          %s153 = scalar_lea.vmem [#allocation3], %s152
          %s154 = smul.u32 2, %s20
          %s156 = ssub.s32 128, 128
          %157 = vsyncadd %s150, %s156
          %s158 = smul.addr %s154, 2
          %s159 = sadd.s32 %s21, %s158
          %s160 = smul.addr %s159, 64
          %s161 = scalar_lea.hbm %s0, %s160
          %s162 = sshll.u32 %s153, 4
          %s163 = int_to_ptr.vmem [resolvable:$true] %s162
          %168 = dma.hbm_to_vmem [thread:$0]  %s161, 128, %s163, %s150, 128, 64, 4
        $region28: #{tpu_custom_call.1} parent=23 // pred_fallthru
          _
      $region24: #{tpu_custom_call.1} parent=5 // pred_fallthru
        _
      %p169 = scmp.le.s32.totalorder 1, %s13
      %p170 = scmp.lt.s32.totalorder %s13, 3
      %p171 = pnand %p169, %p170
      %p172 = pneg %p171
      // Predicated region
      $region29: #{tpu_custom_call.1} parent=5 // pred_check
        _
      $region30: #{tpu_custom_call.1} parent=5 // pred_check_branch
        %174 = sbr.rel (%p171) target = $region32
      $region31: #{tpu_custom_call.1} parent=5 // pred_region
        %s175 = ssub.s32 %s13, 1
        %s176 = sand.u32 %s40, 1
        %s177 = scalar_lea.sflag [#allocation4], %s176
        %s178 = sand.u32 %s40, 1
        %s179 = smul.addr %s178, 8
        %s180 = scalar_lea.vmem [#allocation3], %s179
        // Predicated region
        $region33: #{tpu_custom_call.1} parent=31 // pred_check
          %p181 = pneg %p53
        $region34: #{tpu_custom_call.1} parent=31 // pred_check_branch
          %183 = sbr.rel (%p181) target = $region36
        $region35: #{tpu_custom_call.1} parent=31 // pred_region
          %184 = dma.done %s177, 128
        $region36: #{tpu_custom_call.1} parent=31 // pred_fallthru
          _
        %s185 = sand.u32 %s40, 1
        %s186 = scalar_lea.sflag [#allocation4], %s185
        %s187 = sand.u32 %s40, 1
        %s188 = smul.addr %s187, 8
        %s189 = scalar_lea.vmem [#allocation3], %s188
        %p190 = pneg %p53
        %p191 = pneg %p50
        %p192 = pneg %p74
        %p193 = pneg %p71
        %p194 = pneg %p95
        %p195 = pneg %p92
        %p196 = pneg %p121
        %p197 = pneg %p118
        %s198 = smul.u32 2, %s22
        %p199 = scmp.eq.s32.totalorder %s23, 0
        // Predicated region
        $region37: #{tpu_custom_call.1} parent=31 // pred_check
          %p200 = pneg %p199
        $region38: #{tpu_custom_call.1} parent=31 // pred_check_branch
          %202 = sbr.rel (%p200) target = $region40
        $region39: #{tpu_custom_call.1} parent=31 // pred_region
          %vm203 = vcmask 25600
          %204 = vst.msk [vmem:[#allocation2] sm:$0x3] %vm203, 0.0
        $region40: #{tpu_custom_call.1} parent=31 // pred_fallthru
          _
        %v205 = vld [vmem:[%s180] sm:$0xf]
        %v206 = vld [vmem:[%s180 + $0x4] sm:$0xf]
        %v207 = vld [vmem:[#allocation2] sm:$0x3]
        %vm208 = vcmask 1043456
        %v209 = vsel %vm208, %v205, 0.0
        %210 = vadd.xlane.f32.xlu0 %v209
        %v211 = vpop.xlane.xlu0 %210
        %v212 = vsel %vm208, %v206, 0.0
        %213 = vadd.xlane.f32.xlu0 %v212
        %v214 = vpop.xlane.xlu0 %213
        %v217 = vlaneseq
        %v218 = vand.u32 %v217, 127
        %v219 = vlaneseq
        %v220 = vshrl.u32 %v219, 7
        %v221 = vsub.s32 %v218, %v220
        %v222 = vrot.slane %v211, %v221
        %v223 = vlaneseq
        %v224 = vshrl.u32 %v223, 7
        %v225 = vsub.s32 %v218, %v224
        %v226 = vrot.slane %v214, %v225
        %vm227 = vcmask 1041409
        %v228 = vsel %vm227, %v226, %v222
        %v230 = vadd.f32 %v207, %v228
        %vm231 = vcmask 25600
        %232 = vst.msk [vmem:[#allocation2] sm:$0x3] %vm231, %v230
        %p233 = scmp.eq.s32.totalorder %s23, 1
        // Predicated region
        $region41: #{tpu_custom_call.1} parent=31 // pred_check
          %p234 = pneg %p233
        $region42: #{tpu_custom_call.1} parent=31 // pred_check_branch
          %236 = sbr.rel (%p234) target = $region44
        $region43: #{tpu_custom_call.1} parent=31 // pred_region
          %v237 = vld [vmem:[#allocation2] sm:$0x3]
          %v238 = vmul.f32 %v237, 0.00390625
          %v239 = vld [vmem:[%s1] sm:$0xf]
          %vm240 = vcmask 31744
          %v242 = vsel %vm240, %v238, 0
          %v245 = vsel %vm208, %v239, 0
          %247 = vmatprep.subr.mxu0 0.0
          %248 = vmatpush1.msra.mxu0 0.0
          %249 = vmatprep.subr.mxu0 0.0
          %250 = vmatpush1.msra.mxu0 0.0
          %251 = vmatprep.subr.mxu0 0.0
          %252 = vmatpush1.msra.mxu0 0.0
          %253 = vmatprep.subr.mxu0 0.0
          %254 = vmatpush1.msra.mxu0 0.0
          %255 = vmatprep.subr.mxu0 0.0
          %256 = vmatpush1.msra.mxu0 0.0
          %257 = vmatprep.subr.mxu0 0.0
          %258 = vmatpush1.msra.mxu0 0.0
          %259 = vmatprep.subr.mxu0 0.0
          %260 = vmatpush1.msra.mxu0 0.0
          %261 = vmatprep.subr.mxu0 0.0
          %262 = vmatpush1.msra.mxu0 0.0
          %263 = vmatprep.subr.mxu0 0.0
          %264 = vmatpush1.msra.mxu0 0.0
          %265 = vmatprep.subr.mxu0 0.0
          %266 = vmatpush1.msra.mxu0 0.0
          %267 = vmatprep.subr.mxu0 0.0
          %268 = vmatpush1.msra.mxu0 0.0
          %269 = vmatprep.subr.mxu0 0.0
          %270 = vmatpush1.msra.mxu0 0.0
          %271 = vmatprep.subr.mxu0 0.0
          %272 = vmatpush1.msra.mxu0 0.0
          %273 = vmatprep.subr.mxu0 0.0
          %274 = vmatpush1.msra.mxu0 0.0
          %275 = vmatprep.subr.mxu0 0.0
          %276 = vmatpush1.msra.mxu0 0.0
          %277 = vmatprep.subr.mxu0 0.0
          %278 = vmatpush1.msra.mxu0 %v245
          %279 = vmatprep.subr.mxu0 0.0
          %280 = vmatpush2.msra.mxu0 0.0
          %281 = vmatprep.subr.mxu0 0.0
          %282 = vmatpush2.msra.mxu0 0.0
          %283 = vmatprep.subr.mxu0 0.0
          %284 = vmatpush2.msra.mxu0 0.0
          %285 = vmatprep.subr.mxu0 0.0
          %286 = vmatpush2.msra.mxu0 0.0
          %287 = vmatprep.subr.mxu0 0.0
          %288 = vmatpush2.msra.mxu0 0.0
          %289 = vmatprep.subr.mxu0 0.0
          %290 = vmatpush2.msra.mxu0 0.0
          %291 = vmatprep.subr.mxu0 0.0
          %292 = vmatpush2.msra.mxu0 0.0
          %293 = vmatprep.subr.mxu0 0.0
          %294 = vmatpush2.msra.mxu0 0.0
          %295 = vmatprep.subr.mxu0 0.0
          %296 = vmatpush2.msra.mxu0 0.0
          %297 = vmatprep.subr.mxu0 0.0
          %298 = vmatpush2.msra.mxu0 0.0
          %299 = vmatprep.subr.mxu0 0.0
          %300 = vmatpush2.msra.mxu0 0.0
          %301 = vmatprep.subr.mxu0 0.0
          %302 = vmatpush2.msra.mxu0 0.0
          %303 = vmatprep.subr.mxu0 0.0
          %304 = vmatpush2.msra.mxu0 0.0
          %305 = vmatprep.subr.mxu0 0.0
          %306 = vmatpush2.msra.mxu0 0.0
          %307 = vmatprep.subr.mxu0 0.0
          %308 = vmatpush2.msra.mxu0 0.0
          %309 = vmatprep.subr.mxu0 0.0
          %310 = vmatpush2.msra.mxu0 0.0
          %311 = vmatprep.mubr.f32.mxu0 0.0
          %312 = vmatmul.mubr.f32.gmra.mxu0 %v242
          %v313 = vpop.f32.mrf.mxu0
          %v314 = vadd.f32 0.0, %v313
          %v315 = vpop.f32.mrf.mxu0
          %316 = vdwg.mxu0
          %v317 = vmax.f32 %v314, 0.0
          %v318 = vld [vmem:[%s2] sm:$0xff]
          %vm319 = vcmask 64512
          %v321 = vsel %vm319, %v317, 0
          %323 = vmatprep.subr.mxu0 0.0
          %324 = vmatpush1.msra.mxu0 0.0
          %325 = vmatprep.subr.mxu0 0.0
          %326 = vmatpush1.msra.mxu0 0.0
          %327 = vmatprep.subr.mxu0 0.0
          %328 = vmatpush1.msra.mxu0 0.0
          %329 = vmatprep.subr.mxu0 0.0
          %330 = vmatpush1.msra.mxu0 0.0
          %331 = vmatprep.subr.mxu0 0.0
          %332 = vmatpush1.msra.mxu0 0.0
          %333 = vmatprep.subr.mxu0 0.0
          %334 = vmatpush1.msra.mxu0 0.0
          %335 = vmatprep.subr.mxu0 0.0
          %336 = vmatpush1.msra.mxu0 0.0
          %337 = vmatprep.subr.mxu0 0.0
          %338 = vmatpush1.msra.mxu0 0.0
          %339 = vmatprep.subr.mxu0 0.0
          %340 = vmatpush1.msra.mxu0 0.0
          %341 = vmatprep.subr.mxu0 0.0
          %342 = vmatpush1.msra.mxu0 0.0
          %343 = vmatprep.subr.mxu0 0.0
          %344 = vmatpush1.msra.mxu0 0.0
          %345 = vmatprep.subr.mxu0 0.0
          %346 = vmatpush1.msra.mxu0 0.0
          %347 = vmatprep.subr.mxu0 0.0
          %348 = vmatpush1.msra.mxu0 0.0
          %349 = vmatprep.subr.mxu0 0.0
          %350 = vmatpush1.msra.mxu0 0.0
          %351 = vmatprep.subr.mxu0 0.0
          %352 = vmatpush1.msra.mxu0 0.0
          %353 = vmatprep.subr.mxu0 0.0
          %354 = vmatpush1.msra.mxu0 %v318
          %355 = vmatprep.subr.mxu0 0.0
          %356 = vmatpush2.msra.mxu0 0.0
          %357 = vmatprep.subr.mxu0 0.0
          %358 = vmatpush2.msra.mxu0 0.0
          %359 = vmatprep.subr.mxu0 0.0
          %360 = vmatpush2.msra.mxu0 0.0
          %361 = vmatprep.subr.mxu0 0.0
          %362 = vmatpush2.msra.mxu0 0.0
          %363 = vmatprep.subr.mxu0 0.0
          %364 = vmatpush2.msra.mxu0 0.0
          %365 = vmatprep.subr.mxu0 0.0
          %366 = vmatpush2.msra.mxu0 0.0
          %367 = vmatprep.subr.mxu0 0.0
          %368 = vmatpush2.msra.mxu0 0.0
          %369 = vmatprep.subr.mxu0 0.0
          %370 = vmatpush2.msra.mxu0 0.0
          %371 = vmatprep.subr.mxu0 0.0
          %372 = vmatpush2.msra.mxu0 0.0
          %373 = vmatprep.subr.mxu0 0.0
          %374 = vmatpush2.msra.mxu0 0.0
          %375 = vmatprep.subr.mxu0 0.0
          %376 = vmatpush2.msra.mxu0 0.0
          %377 = vmatprep.subr.mxu0 0.0
          %378 = vmatpush2.msra.mxu0 0.0
          %379 = vmatprep.subr.mxu0 0.0
          %380 = vmatpush2.msra.mxu0 0.0
          %381 = vmatprep.subr.mxu0 0.0
          %382 = vmatpush2.msra.mxu0 0.0
          %383 = vmatprep.subr.mxu0 0.0
          %384 = vmatpush2.msra.mxu0 0.0
          %385 = vmatprep.subr.mxu0 0.0
          %386 = vmatpush2.msra.mxu0 0.0
          %387 = vmatprep.mubr.f32.mxu0 0.0
          %388 = vmatmul.mubr.f32.gmra.mxu0 %v321
          %v389 = vpop.f32.mrf.mxu0
          %v390 = vadd.f32 0.0, %v389
          %v391 = vpop.f32.mrf.mxu0
          %392 = vdwg.mxu0
          %v393 = vxor.u32 %v390, 2147483648
          %v394 = vmul.f32 %v393, 1.442695
          %v395 = vpow.pop %v394
          %v396 = vadd.f32 %v395, 1.0
          %v397 = vrcp.pop %v396
          %v398 = vmul.f32 1.0, %v397
          %399 = vst.msk [vmem:[#allocation6] sm:$0x3] %vm231, %v398
        $region44: #{tpu_custom_call.1} parent=31 // pred_fallthru
          _
        // Predicated region
        $region45: #{tpu_custom_call.1} parent=31 // pred_check
          %p400 = pneg %p118
        $region46: #{tpu_custom_call.1} parent=31 // pred_check_branch
          %402 = sbr.rel (%p400) target = $region48
        $region47: #{tpu_custom_call.1} parent=31 // pred_region
          %s404 = ssub.s32 32, 32
          %405 = vsyncadd [#allocation5], %s404
          %s406 = smul.addr %s22, 32
          %s407 = scalar_lea.hbm %s3, %s406
          %s409 = sshll.u32 [#allocation6], 4
          %s410 = int_to_ptr.vmem [resolvable:$true] %s409
          %412 = dma.vmem_to_hbm [thread:$0]  %s410, 32, %s407, [#allocation5]
        $region48: #{tpu_custom_call.1} parent=31 // pred_fallthru
          _
        // Predicated region
        $region49: #{tpu_custom_call.1} parent=31 // pred_check
          %p413 = pneg %p118
        $region50: #{tpu_custom_call.1} parent=31 // pred_check_branch
          %415 = sbr.rel (%p413) target = $region52
        $region51: #{tpu_custom_call.1} parent=31 // pred_region
          %416 = dma.done [#allocation5], 32
        $region52: #{tpu_custom_call.1} parent=31 // pred_fallthru
          _
      $region32: #{tpu_custom_call.1} parent=5 // pred_fallthru
        _
      %p417 = scmp.le.s32.totalorder 2, %s13
      // Predicated region
      $region53: #{tpu_custom_call.1} parent=5 // pred_check
        %p418 = pneg %p417
      $region54: #{tpu_custom_call.1} parent=5 // pred_check_branch
        %420 = sbr.rel (%p418) target = $region56
      $region55: #{tpu_custom_call.1} parent=5 // pred_region
        %s421 = ssub.s32 %s13, 2
      $region56: #{tpu_custom_call.1} parent=5 // pred_fallthru
        _
    $region6: #{tpu_custom_call.1} parent=1 // loop_footer
      %s17 = sadd.s32 1, %s13
    $region7: #{tpu_custom_call.1} parent=1 // loop_footer_branch
      %12 = sbr.rel target = $region3
    $region8: #{tpu_custom_call.1} parent=1 // loop_exit
      _
    %422 = vsyncpa [#allocation4], 1
    %s423 = scalar_lea.sflag [#allocation4], 1
    %424 = vsyncpa %s423, 1
    %425 = vsyncpa [#allocation5], 1
    %s426 = scalar_lea.sflag [#allocation5], 1
    %427 = vsyncpa %s426, 1

</llo_original>
